<compile_context>
chip_gen: v7x
topology: tpu7x:2x2x1
jax: 0.10.0
libtpu: 0.0.40
codegen_flags: <defaults>
</compile_context>

<pallas_src>
import jax
import jax.numpy as jnp
from jax.experimental import pallas as pl
from jax.experimental.pallas import tpu as pltpu


def _predictor_kernel(v1_ref, v2_ref, w_ref, b_ref, o_ref):
    # Grid-invariant parameters (same block every grid step).
    w = w_ref[...]                              # [F, 1]
    bias = b_ref[...].astype(jnp.float32)       # [1, 1]

    # Linear(F, 1): one MXU matmul per input tile, accumulated in f32.
    a = jnp.dot(v1_ref[...], w, preferred_element_type=jnp.float32) + bias   # [TB, 1]
    b = jnp.dot(v2_ref[...], w, preferred_element_type=jnp.float32) + bias   # [TB, 1]

    # Numerically stable log-softmax over the two logits (dim=1).
    m = jnp.maximum(a, b)                                                    # [TB, 1]
    lse = m + jnp.log(jnp.exp(a - m) + jnp.exp(b - m))                       # [TB, 1]

    # Write the two output columns directly (no cross-lane concatenate).
    # On the ragged edge block, rows past B are never written back by Pallas.
    o_ref[:, 0:1] = (a - lse).astype(o_ref.dtype)
    o_ref[:, 1:2] = (b - lse).astype(o_ref.dtype)


def _round_up(x, m):
    return ((x + m - 1) // m) * m


# Generation-safe scoped-VMEM numbers: budget 40 MiB of accounted usage and ask
# the compiler for a 48 MiB limit (v7x has 64 MiB physical; v5e/v6e have 128 MiB).
_VMEM_BUDGET = 40 << 20
_VMEM_LIMIT = 48 << 20
_TARGET_TILE_BYTES = 4 << 20     # per-input-tile DMA size to amortize step overhead
_MIN_TILE_BYTES = 1 << 20        # don't shrink tiles below this just to add grid steps


def _choose_tb(B, F, itemsize):
    """Pick the batch-tile row count and the (sublane-only) padded batch size."""
    b_pad = _round_up(B, 8)
    # Bytes of VMEM per tile row, across the pipeline:
    #   2 input tiles x 2 pipeline buffers x F*itemsize
    # + output block (tb, 2) lane-padded to (tb, 128) f32, x 2 buffers.
    per_row = 2 * 2 * F * itemsize + 2 * 128 * 4
    tb_vmem = _VMEM_BUDGET // per_row
    tb_target = max(8, _TARGET_TILE_BYTES // (F * itemsize))
    tb = min(tb_vmem, tb_target)
    # Keep >=4 grid steps when the batch allows it (v7x: 2 TCs x double buffer),
    # but never drop the input tile below ~1 MiB.
    min_tile_rows = max(8, _MIN_TILE_BYTES // (F * itemsize))
    if b_pad // 4 >= min_tile_rows:
        tb = min(tb, b_pad // 4)
    tb = min(tb, b_pad)                 # no point in a tile larger than the batch
    tb = max(8, (tb // 8) * 8)          # sublane (8) alignment
    return tb, b_pad


def predictor_forward(vec1, vec2, weight, bias):
    """vec1, vec2: [B, F]; weight: [1, F] (PyTorch nn.Linear layout); bias: [1]."""
    B, F = vec1.shape
    itemsize = jnp.dtype(vec1.dtype).itemsize

    # Weight as a column so the dot runs on the MXU; bias as a (1, 1) tile.
    w_col = weight.reshape(F, 1)
    bias2d = bias.reshape(1, 1).astype(jnp.float32)

    tb, b_pad = _choose_tb(B, F, itemsize)

    # Pad only to the sublane multiple (8), never to a multiple of tb — the
    # ragged edge block is handled by Pallas (OOB outputs are discarded).
    if b_pad != B:
        pad = ((0, b_pad - B), (0, 0))
        vec1 = jnp.pad(vec1, pad)
        vec2 = jnp.pad(vec2, pad)

    grid = (pl.cdiv(b_pad, tb),)

    cost = pl.CostEstimate(
        flops=4 * b_pad * F + 8 * b_pad,          # two [TB,F]x[F,1] matmuls + epilogue
        transcendentals=3 * b_pad,                # 2 exp + 1 log per row
        bytes_accessed=(2 * b_pad * F * itemsize            # both input streams
                        + grid[0] * F * itemsize            # weight, re-fetched per step
                        + b_pad * 2 * 4),                    # output
    )

    out = pl.pallas_call(
        _predictor_kernel,
        out_shape=jax.ShapeDtypeStruct((b_pad, 2), jnp.float32),
        grid_spec=pltpu.PrefetchScalarGridSpec(
            num_scalar_prefetch=0,
            grid=grid,
            in_specs=[
                pl.BlockSpec((tb, F), lambda i: (i, 0)),     # vec1 tile
                pl.BlockSpec((tb, F), lambda i: (i, 0)),     # vec2 tile
                pl.BlockSpec((F, 1), lambda i: (0, 0)),      # weight column (grid-invariant)
                pl.BlockSpec((1, 1), lambda i: (0, 0)),      # bias (grid-invariant)
            ],
            out_specs=pl.BlockSpec((tb, 2), lambda i: (i, 0)),
        ),
        compiler_params=pltpu.CompilerParams(
            dimension_semantics=("parallel",),               # megacore-shardable batch axis
            vmem_limit_bytes=_VMEM_LIMIT,                    # match the Python-side budget
        ),
        cost_estimate=cost,
    )(vec1, vec2, w_col, bias2d)

    return out[:B]


def _reference(vec1, vec2, weight, bias):
    a = vec1 @ weight.T + bias                     # [B, 1]
    b = vec2 @ weight.T + bias                     # [B, 1]
    combined = jnp.concatenate([a, b], axis=1)     # [B, 2]
    return jax.nn.log_softmax(combined, axis=1)


def _run_case(key, B, F):
    k1, k2, k3, k4 = jax.random.split(key, 4)
    vec1 = jax.random.normal(k1, (B, F), dtype=jnp.float32)
    vec2 = jax.random.normal(k2, (B, F), dtype=jnp.float32)
    bound = 1.0 / jnp.sqrt(F)
    weight = jax.random.uniform(k3, (1, F), minval=-bound, maxval=bound,
                                dtype=jnp.float32)
    bias = jax.random.uniform(k4, (1,), minval=-bound, maxval=bound,
                              dtype=jnp.float32)
    out = jax.block_until_ready(predictor_forward(vec1, vec2, weight, bias))
    ref = _reference(vec1, vec2, weight, bias)
    assert out.shape == (B, 2), (out.shape, B)
    assert jnp.allclose(out, ref, atol=1e-5, rtol=1e-5)


if __name__ == "__main__":
    # Small shapes implied by the module: batch=2, feature_len=32.
    _run_case(jax.random.PRNGKey(0), B=2, F=32)

    # Larger batch: exercises big-tile sizing without any pad-to-tile copy.
    _run_case(jax.random.PRNGKey(1), B=1000, F=256)

    # Multi-step grid with a ragged edge block (5000 = 4*1248 + 8 at F=512).
    _run_case(jax.random.PRNGKey(2), B=5000, F=512)

    print("KERNEL_OK")
</pallas_src>

<mosaic_0001>
module attributes {stable_mosaic.version = 11 : i64} {
  func.func @_predictor_kernel(%arg0: i32, %arg1: memref<8x32xf32, #tpu.memory_space<vmem>>, %arg2: memref<8x32xf32, #tpu.memory_space<vmem>>, %arg3: memref<32x1xf32, #tpu.memory_space<vmem>>, %arg4: memref<1x1xf32, #tpu.memory_space<vmem>>, %arg5: memref<8x2xf32, #tpu.memory_space<vmem>>) attributes {dimension_semantics = [#tpu.dimension_semantics<parallel>], iteration_bounds = array<i64: 1>, scalar_prefetch = 0 : i64, scratch_operands = 0 : i64, tpu.core_type = #tpu.core_type<tc>, window_params = [{transform_indices = @transform_0, window_bounds = array<i64: 8, 32>}, {transform_indices = @transform_1, window_bounds = array<i64: 8, 32>}, {pipeline_mode = #tpu.pipeline_mode<synchronous>, transform_indices = @transform_2, window_bounds = array<i64: 32, 1>}, {pipeline_mode = #tpu.pipeline_mode<synchronous>, transform_indices = @transform_3, window_bounds = array<i64: 1, 1>}, {transform_indices = @transform_4, window_bounds = array<i64: 8, 2>}]} {
    %c0 = arith.constant 0 : index
    %c0_0 = arith.constant 0 : index
    %0 = vector.load %arg3[%c0, %c0_0] : memref<32x1xf32, #tpu.memory_space<vmem>>, vector<32x1xf32>
    %c0_1 = arith.constant 0 : index
    %c0_2 = arith.constant 0 : index
    %1 = vector.load %arg4[%c0_1, %c0_2] : memref<1x1xf32, #tpu.memory_space<vmem>>, vector<1x1xf32>
    %c0_3 = arith.constant 0 : index
    %c0_4 = arith.constant 0 : index
    %2 = vector.load %arg1[%c0_3, %c0_4] : memref<8x32xf32, #tpu.memory_space<vmem>>, vector<8x32xf32>
    %cst = arith.constant dense<0.000000e+00> : vector<8x1xf32>
    %3 = tpu.matmul %2, %0, %cst {dimension_numbers = #tpu.dot_dimension_numbers<[1], [0], [0], [1], [0, 0, 1, 1], [], []>} : vector<8x32xf32>, vector<32x1xf32>, vector<8x1xf32> -> vector<8x1xf32>
    %4 = vector.broadcast %1 : vector<1x1xf32> to vector<8x1xf32>
    %5 = arith.addf %3, %4 : vector<8x1xf32>
    %c0_5 = arith.constant 0 : index
    %c0_6 = arith.constant 0 : index
    %6 = vector.load %arg2[%c0_5, %c0_6] : memref<8x32xf32, #tpu.memory_space<vmem>>, vector<8x32xf32>
    %cst_7 = arith.constant dense<0.000000e+00> : vector<8x1xf32>
    %7 = tpu.matmul %6, %0, %cst_7 {dimension_numbers = #tpu.dot_dimension_numbers<[1], [0], [0], [1], [0, 0, 1, 1], [], []>} : vector<8x32xf32>, vector<32x1xf32>, vector<8x1xf32> -> vector<8x1xf32>
    %8 = vector.broadcast %1 : vector<1x1xf32> to vector<8x1xf32>
    %9 = arith.addf %7, %8 : vector<8x1xf32>
    %10 = arith.maximumf %5, %9 : vector<8x1xf32>
    %11 = arith.subf %5, %10 : vector<8x1xf32>
    %12 = math.exp %11 : vector<8x1xf32>
    %13 = arith.subf %9, %10 : vector<8x1xf32>
    %14 = math.exp %13 : vector<8x1xf32>
    %15 = arith.addf %12, %14 : vector<8x1xf32>
    %16 = math.log %15 : vector<8x1xf32>
    %17 = arith.addf %10, %16 : vector<8x1xf32>
    %18 = arith.subf %5, %17 : vector<8x1xf32>
    %c0_8 = arith.constant 0 : index
    %c0_9 = arith.constant 0 : index
    %19 = vector.load %arg5[%c0_8, %c0_9] : memref<8x2xf32, #tpu.memory_space<vmem>>, vector<8x1xf32>
    tpu.vector_store %arg5[%c0_8, %c0_9], %18 {strides = array<i32>} : memref<8x2xf32, #tpu.memory_space<vmem>>, vector<8x1xf32>,
    %20 = arith.subf %9, %17 : vector<8x1xf32>
    %c0_10 = arith.constant 0 : index
    %c1 = arith.constant 1 : index
    %21 = vector.load %arg5[%c0_10, %c1] : memref<8x2xf32, #tpu.memory_space<vmem>>, vector<8x1xf32>
    tpu.vector_store %arg5[%c0_10, %c1], %20 {strides = array<i32>} : memref<8x2xf32, #tpu.memory_space<vmem>>, vector<8x1xf32>,
    return
  }
  func.func @transform_0(%arg0: i32) -> (i32, i32) {
    %c0_i32 = arith.constant 0 : i32
    %c0_i32_0 = arith.constant 0 : i32
    return %arg0, %c0_i32 : i32, i32
  }
  func.func @transform_1(%arg0: i32) -> (i32, i32) {
    %c0_i32 = arith.constant 0 : i32
    %c0_i32_0 = arith.constant 0 : i32
    return %arg0, %c0_i32 : i32, i32
  }
  func.func @transform_2(%arg0: i32) -> (i32, i32) {
    %c0_i32 = arith.constant 0 : i32
    %c0_i32_0 = arith.constant 0 : i32
    %c0_i32_1 = arith.constant 0 : i32
    return %c0_i32, %c0_i32_0 : i32, i32
  }
  func.func @transform_3(%arg0: i32) -> (i32, i32) {
    %c0_i32 = arith.constant 0 : i32
    %c0_i32_0 = arith.constant 0 : i32
    %c0_i32_1 = arith.constant 0 : i32
    return %c0_i32, %c0_i32_0 : i32, i32
  }
  func.func @transform_4(%arg0: i32) -> (i32, i32) {
    %c0_i32 = arith.constant 0 : i32
    %c0_i32_0 = arith.constant 0 : i32
    return %arg0, %c0_i32 : i32, i32
  }
}

</mosaic_0001>

<llo_original>
// kernel: tpu_custom_call.1
$region0: #{tpu_custom_call.1}
  #allocation0 [shape = 'u32[]', space=smem, size = 0x4, offset = 0x4, fixed_abs, tag = 'smem constant byte address 0x4 - core index']
  #allocation1 [shape = 'u32[144,128]{1,0:T(1,128)}', space=vmem, size = 0x12000, scoped, tag = 'internal scratch']
  #allocation2 [shape = 'f32[1,1]{1,0:T(1,128)S(1)}', space=vmem, size = 0x200, scoped, tag = 'scoped memory for tpu_custom_call.1']
  %s0 = inlined_call_operand.vmem [shape: f32[8,32], index: 0, kind: input, shape index: {}]
  %s1 = inlined_call_operand.vmem [shape: f32[8,32], index: 1, kind: input, shape index: {}]
  %s2 = inlined_call_operand.vmem [shape: f32[32,1], index: 2, kind: input, shape index: {}]
  %s3 = inlined_call_operand.<no memory space> [shape: f32[1,1], index: 3, kind: input, shape index: {}]
  %s4 = inlined_call_operand.vmem [shape: f32[8,2], index: 4, kind: output, shape index: {}]
  %s5 = sld [smem:[#allocation0]]
  $region26: #{tpu_custom_call.1} parent=0
    _
  %s7 = ssub.s32 1, %s5
  %s8 = scalar_select 0, %s7, %s5
  %v9 = vstv %s3
  %10 = vst [vmem:[#allocation2] sm:$0x1] %v9
  // Predicated region
  $region2: #{tpu_custom_call.1} parent=0 // pred_check
    _
  $region3: #{tpu_custom_call.1} parent=0 // pred_check_branch
    %12 = sbr.rel (0) target = $region5
  $region4: #{tpu_custom_call.1} parent=0 // pred_region
    _
  $region5: #{tpu_custom_call.1} parent=0 // pred_fallthru
    _
  // Predicated region
  $region6: #{tpu_custom_call.1} parent=0 // pred_check
    _
  $region7: #{tpu_custom_call.1} parent=0 // pred_check_branch
    %14 = sbr.rel (0) target = $region9
  $region8: #{tpu_custom_call.1} parent=0 // pred_region
    _
  $region9: #{tpu_custom_call.1} parent=0 // pred_fallthru
    _
  // Predicated region
  $region10: #{tpu_custom_call.1} parent=0 // pred_check
    _
  $region11: #{tpu_custom_call.1} parent=0 // pred_check_branch
    %16 = sbr.rel (0) target = $region13
  $region12: #{tpu_custom_call.1} parent=0 // pred_region
    _
  $region13: #{tpu_custom_call.1} parent=0 // pred_fallthru
    _
  // Predicated region
  $region14: #{tpu_custom_call.1} parent=0 // pred_check
    _
  $region15: #{tpu_custom_call.1} parent=0 // pred_check_branch
    %18 = sbr.rel (0) target = $region17
  $region16: #{tpu_custom_call.1} parent=0 // pred_region
    _
  $region17: #{tpu_custom_call.1} parent=0 // pred_fallthru
    _
  %v19 = vld [vmem:[%s2] sm:$0xff]
  %v20 = vld [vmem:[%s2 + $0x8] sm:$0xff]
  %v21 = vld [vmem:[%s2 + $0x10] sm:$0xff]
  %v22 = vld [vmem:[%s2 + $0x18] sm:$0xff]
  %v23 = vld [vmem:[#allocation2] sm:$0x1]
  %v24 = vld [vmem:[%s0] sm:$0xff]
  %v26 = vlaneseq
  %v27 = vshrl.u32 %v26, 7
  %v28 = vsub.s32 0, %v27
  %v29 = vrot.slane %v23, %v28
  %vm31 = vcmask 261120
  %v33 = vsel %vm31, %v24, 0
  %35 = vmatprep.subr.mxu0 0.0
  %36 = vmatpush1.msra.mxu0 %v19
  %37 = vmatprep.subr.mxu0 0.0
  %38 = vmatpush1.msra.mxu0 %v20
  %39 = vmatprep.subr.mxu0 0.0
  %40 = vmatpush1.msra.mxu0 %v21
  %41 = vmatprep.subr.mxu0 0.0
  %42 = vmatpush1.msra.mxu0 %v22
  %43 = vmatprep.subr.mxu0 0.0
  %44 = vmatpush1.msra.mxu0 0.0
  %45 = vmatprep.subr.mxu0 0.0
  %46 = vmatpush1.msra.mxu0 0.0
  %47 = vmatprep.subr.mxu0 0.0
  %48 = vmatpush1.msra.mxu0 0.0
  %49 = vmatprep.subr.mxu0 0.0
  %50 = vmatpush1.msra.mxu0 0.0
  %51 = vmatprep.subr.mxu0 0.0
  %52 = vmatpush1.msra.mxu0 0.0
  %53 = vmatprep.subr.mxu0 0.0
  %54 = vmatpush1.msra.mxu0 0.0
  %55 = vmatprep.subr.mxu0 0.0
  %56 = vmatpush1.msra.mxu0 0.0
  %57 = vmatprep.subr.mxu0 0.0
  %58 = vmatpush1.msra.mxu0 0.0
  %59 = vmatprep.subr.mxu0 0.0
  %60 = vmatpush1.msra.mxu0 0.0
  %61 = vmatprep.subr.mxu0 0.0
  %62 = vmatpush1.msra.mxu0 0.0
  %63 = vmatprep.subr.mxu0 0.0
  %64 = vmatpush1.msra.mxu0 0.0
  %65 = vmatprep.subr.mxu0 0.0
  %66 = vmatpush1.msra.mxu0 0.0
  %67 = vmatprep.subr.mxu0 0.0
  %68 = vmatpush1.msra.mxu0 0.0
  %69 = vmatprep.subr.mxu0 0.0
  %70 = vmatpush1.msra.mxu0 0.0
  %71 = vmatprep.subr.mxu0 0.0
  %72 = vmatpush1.msra.mxu0 0.0
  %73 = vmatprep.subr.mxu0 0.0
  %74 = vmatpush1.msra.mxu0 0.0
  %75 = vmatprep.subr.mxu0 0.0
  %76 = vmatpush1.msra.mxu0 0.0
  %77 = vmatprep.subr.mxu0 0.0
  %78 = vmatpush1.msra.mxu0 0.0
  %79 = vmatprep.subr.mxu0 0.0
  %80 = vmatpush1.msra.mxu0 0.0
  %81 = vmatprep.subr.mxu0 0.0
  %82 = vmatpush1.msra.mxu0 0.0
  %83 = vmatprep.subr.mxu0 0.0
  %84 = vmatpush1.msra.mxu0 0.0
  %85 = vmatprep.subr.mxu0 0.0
  %86 = vmatpush1.msra.mxu0 0.0
  %87 = vmatprep.subr.mxu0 0.0
  %88 = vmatpush1.msra.mxu0 0.0
  %89 = vmatprep.subr.mxu0 0.0
  %90 = vmatpush1.msra.mxu0 0.0
  %91 = vmatprep.subr.mxu0 0.0
  %92 = vmatpush1.msra.mxu0 0.0
  %93 = vmatprep.subr.mxu0 0.0
  %94 = vmatpush1.msra.mxu0 0.0
  %95 = vmatprep.subr.mxu0 0.0
  %96 = vmatpush1.msra.mxu0 0.0
  %97 = vmatprep.subr.mxu0 0.0
  %98 = vmatpush1.msra.mxu0 0.0
  %99 = vmatprep.mubr.f32.mxu0 0.0
  %100 = vmatmul.mubr.f32.gmra.mrb[0].mxu0 %v33
  %v101 = vpop.f32.mrb[0].mxu0
  %v102 = vadd.f32 %v29, %v101
  %v103 = vpop.f32.mrb[0].mxu0
  %104 = vdwg.mxu0
  %v105 = vld [vmem:[%s1] sm:$0xff]
  %v107 = vsel %vm31, %v105, 0
  %109 = vmatprep.subr.mxu0 0.0
  %110 = vmatpush1.msra.mxu0 %v19
  %111 = vmatprep.subr.mxu0 0.0
  %112 = vmatpush1.msra.mxu0 %v20
  %113 = vmatprep.subr.mxu0 0.0
  %114 = vmatpush1.msra.mxu0 %v21
  %115 = vmatprep.subr.mxu0 0.0
  %116 = vmatpush1.msra.mxu0 %v22
  %117 = vmatprep.subr.mxu0 0.0
  %118 = vmatpush1.msra.mxu0 0.0
  %119 = vmatprep.subr.mxu0 0.0
  %120 = vmatpush1.msra.mxu0 0.0
  %121 = vmatprep.subr.mxu0 0.0
  %122 = vmatpush1.msra.mxu0 0.0
  %123 = vmatprep.subr.mxu0 0.0
  %124 = vmatpush1.msra.mxu0 0.0
  %125 = vmatprep.subr.mxu0 0.0
  %126 = vmatpush1.msra.mxu0 0.0
  %127 = vmatprep.subr.mxu0 0.0
  %128 = vmatpush1.msra.mxu0 0.0
  %129 = vmatprep.subr.mxu0 0.0
  %130 = vmatpush1.msra.mxu0 0.0
  %131 = vmatprep.subr.mxu0 0.0
  %132 = vmatpush1.msra.mxu0 0.0
  %133 = vmatprep.subr.mxu0 0.0
  %134 = vmatpush1.msra.mxu0 0.0
  %135 = vmatprep.subr.mxu0 0.0
  %136 = vmatpush1.msra.mxu0 0.0
  %137 = vmatprep.subr.mxu0 0.0
  %138 = vmatpush1.msra.mxu0 0.0
  %139 = vmatprep.subr.mxu0 0.0
  %140 = vmatpush1.msra.mxu0 0.0
  %141 = vmatprep.subr.mxu0 0.0
  %142 = vmatpush1.msra.mxu0 0.0
  %143 = vmatprep.subr.mxu0 0.0
  %144 = vmatpush1.msra.mxu0 0.0
  %145 = vmatprep.subr.mxu0 0.0
  %146 = vmatpush1.msra.mxu0 0.0
  %147 = vmatprep.subr.mxu0 0.0
  %148 = vmatpush1.msra.mxu0 0.0
  %149 = vmatprep.subr.mxu0 0.0
  %150 = vmatpush1.msra.mxu0 0.0
  %151 = vmatprep.subr.mxu0 0.0
  %152 = vmatpush1.msra.mxu0 0.0
  %153 = vmatprep.subr.mxu0 0.0
  %154 = vmatpush1.msra.mxu0 0.0
  %155 = vmatprep.subr.mxu0 0.0
  %156 = vmatpush1.msra.mxu0 0.0
  %157 = vmatprep.subr.mxu0 0.0
  %158 = vmatpush1.msra.mxu0 0.0
  %159 = vmatprep.subr.mxu0 0.0
  %160 = vmatpush1.msra.mxu0 0.0
  %161 = vmatprep.subr.mxu0 0.0
  %162 = vmatpush1.msra.mxu0 0.0
  %163 = vmatprep.subr.mxu0 0.0
  %164 = vmatpush1.msra.mxu0 0.0
  %165 = vmatprep.subr.mxu0 0.0
  %166 = vmatpush1.msra.mxu0 0.0
  %167 = vmatprep.subr.mxu0 0.0
  %168 = vmatpush1.msra.mxu0 0.0
  %169 = vmatprep.subr.mxu0 0.0
  %170 = vmatpush1.msra.mxu0 0.0
  %171 = vmatprep.subr.mxu0 0.0
  %172 = vmatpush1.msra.mxu0 0.0
  %173 = vmatprep.mubr.f32.mxu0 0.0
  %174 = vmatmul.mubr.f32.gmra.mrb[0].mxu0 %v107
  %v175 = vpop.f32.mrb[0].mxu0
  %v176 = vadd.f32 %v29, %v175
  %v177 = vpop.f32.mrb[0].mxu0
  %178 = vdwg.mxu0
  %v179 = vmax.f32 %v102, %v176
  %v180 = vsub.f32 %v102, %v179
  %v181 = vmul.f32 %v180, 1.442695
  %v182 = vpow.pop %v181
  %v183 = vsub.f32 %v176, %v179
  %v184 = vmul.f32 %v183, 1.442695
  %v185 = vpow.pop %v184
  %v186 = vadd.f32 %v182, %v185
  %v187 = vlog2.pop %v186
  %v188 = vmul.f32 %v187, 0.6931472
  %v189 = vadd.f32 %v179, %v188
  %v190 = vsub.f32 %v102, %v189
  %vm191 = vcmask 7168
  %192 = vst.msk [vmem:[%s4] sm:$0xff] %vm191, %v190
  %v193 = vsub.f32 %v176, %v189
  %195 = vrot.lane.b32.xlu0 %v193, 1
  %v196 = vpop.permute.xlu0 %195
  %vm198 = vcmask 15368
  %199 = vst.msk [vmem:[%s4] sm:$0xff] %vm198, %v196
  // Predicated region
  $region18: #{tpu_custom_call.1} parent=0 // pred_check
    _
  $region19: #{tpu_custom_call.1} parent=0 // pred_check_branch
    %201 = sbr.rel (0) target = $region21
  $region20: #{tpu_custom_call.1} parent=0 // pred_region
    _
  $region21: #{tpu_custom_call.1} parent=0 // pred_fallthru
    _
  // Predicated region
  $region22: #{tpu_custom_call.1} parent=0 // pred_check
    _
  $region23: #{tpu_custom_call.1} parent=0 // pred_check_branch
    %203 = sbr.rel (0) target = $region25
  $region24: #{tpu_custom_call.1} parent=0 // pred_region
    _
  $region25: #{tpu_custom_call.1} parent=0 // pred_fallthru
    _

</llo_original>
